<compile_context>
chip_gen: v5e
topology: v5e:2x2
jax: 0.10.0
libtpu: 0.0.40
codegen_flags: <defaults>
</compile_context>

<pallas_src>
import jax
import jax.numpy as jnp
from jax import lax
from jax.experimental import pallas as pl
from jax.experimental.pallas import tpu as pltpu


def make_positional_encodings(vocab_size, d_model):
    # Faithful reproduction of the PyTorch loop (uses 2*i in the exponent for both
    # even and odd i — intentional, matches the module, not the standard formula).
    pos = jnp.arange(vocab_size, dtype=jnp.float32)[:, None]   # (V, 1)
    i = jnp.arange(d_model, dtype=jnp.float32)[None, :]        # (1, D)
    angle = pos / jnp.power(10000.0, 2.0 * i / d_model)        # (V, D)
    even_mask = (jnp.arange(d_model) % 2 == 0)[None, :]
    return jnp.where(even_mask, jnp.sin(angle), jnp.cos(angle)).astype(jnp.float32)


def _choose_token_block(S, cap=256):
    """Largest token-block size: full S when small, else a multiple-of-8 divisor <= cap."""
    if S <= cap:
        return S
    for ts in range(cap, 7, -1):
        if S % ts == 0 and ts % 8 == 0:
            return ts
    return S  # fallback: whole sequence per step (full-extent block is always legal)


def embedding_layer_forward(x_ids, table, pos_enc):
    B, S = x_ids.shape
    V, D = table.shape
    assert pos_enc.shape == (V, D)
    # The PyTorch forward broadcasts (B, S, D) + (V, D): only valid when S == V.
    assert S == V, "EmbeddingLayer's positional-encoding broadcast requires S == vocab_size"

    TS = _choose_token_block(S)
    NT = S // TS

    # Flatten ids to 1D for scalar prefetch (2D SMEM arrays pad to 8x128 words),
    # and clamp so a bad id can never drive an OOB sublane read.
    ids_flat = jnp.clip(x_ids.reshape(-1).astype(jnp.int32), 0, V - 1)

    def kernel(ids_ref, table_ref, pos_ref, out_ref):
        # ids_ref:   (B*S,) int32 in SMEM (scalar prefetch)
        # table_ref: (V, D)  full embedding table, VMEM-resident (DMA'd once)
        # pos_ref:   (TS, D) positional-encoding rows for this token block
        # out_ref:   (TS, D) output block (leading batch dim squeezed)
        b = pl.program_id(0)
        t = pl.program_id(1)
        base = b * S + t * TS

        def body(i, carry):
            idx = ids_ref[base + i]
            out_ref[pl.ds(i, 1), :] = (
                table_ref[pl.ds(idx, 1), :] + pos_ref[pl.ds(i, 1), :]
            )
            return carry

        lax.fori_loop(0, TS, body, 0, unroll=(TS <= 64))

    out = pl.pallas_call(
        kernel,
        out_shape=jax.ShapeDtypeStruct((B, S, D), jnp.float32),
        grid_spec=pltpu.PrefetchScalarGridSpec(
            num_scalar_prefetch=1,
            grid=(B, NT),
            in_specs=[
                # Full table, constant block index -> fetched into VMEM exactly once.
                pl.BlockSpec((V, D), lambda b, t, ids: (0, 0)),
                # Positional-encoding rows for this token block.
                pl.BlockSpec((TS, D), lambda b, t, ids: (t, 0)),
            ],
            # Leading batch dim squeezed; (TS, D) block: TS % 8 == 0 or TS == S,
            # last dim = full extent D (no lane padding, no wrapper slice copy).
            out_specs=pl.BlockSpec((None, TS, D), lambda b, t, ids: (b, t, 0)),
        ),
        compiler_params=pltpu.CompilerParams(
            dimension_semantics=("parallel", "parallel")),
    )(ids_flat, table, pos_enc)

    return out


if __name__ == "__main__":
    vocab_size = 16     # V
    d_model = 32        # D
    batch = 2           # B
    seq = vocab_size    # S must equal V for the module's broadcast to be valid

    key = jax.random.PRNGKey(0)
    k_emb, k_ids = jax.random.split(key)

    # nn.Embedding default init: N(0, 1)
    table = jax.random.normal(k_emb, (vocab_size, d_model), dtype=jnp.float32)
    pos_enc = make_positional_encodings(vocab_size, d_model)
    x_ids = jax.random.randint(k_ids, (batch, seq), 0, vocab_size, dtype=jnp.int32)

    out = embedding_layer_forward(x_ids, table, pos_enc)
    out = jax.block_until_ready(out)

    # Reference check in plain JAX.
    ref = jnp.take(table, x_ids, axis=0) + pos_enc[None, :, :]
    assert out.shape == (batch, seq, d_model)
    assert jnp.allclose(out, ref, atol=1e-5, rtol=1e-5)

    print("KERNEL_OK")
</pallas_src>

<mosaic_0001>
module attributes {stable_mosaic.version = 11 : i64} {
  func.func @kernel(%arg0: i32, %arg1: i32, %arg2: memref<32xi32, #tpu.memory_space<smem>>, %arg3: memref<16x32xf32, #tpu.memory_space<vmem>>, %arg4: memref<16x32xf32, #tpu.memory_space<vmem>>, %arg5: memref<1x16x32xf32, #tpu.memory_space<vmem>>) attributes {dimension_semantics = [#tpu.dimension_semantics<parallel>, #tpu.dimension_semantics<parallel>], iteration_bounds = array<i64: 2, 1>, scalar_prefetch = 1 : i64, scratch_operands = 0 : i64, tpu.core_type = #tpu.core_type<tc>, window_params = [{pipeline_mode = #tpu.pipeline_mode<synchronous>, transform_indices = @transform_0, window_bounds = array<i64: 16, 32>}, {transform_indices = @transform_1, window_bounds = array<i64: 16, 32>}, {transform_indices = @transform_2, window_bounds = array<i64: 1, 16, 32>}]} {
    %c16_i32 = arith.constant 16 : i32
    %0 = arith.muli %arg0, %c16_i32 : i32
    %c16_i32_0 = arith.constant 16 : i32
    %1 = arith.muli %arg1, %c16_i32_0 : i32
    %2 = arith.addi %0, %1 : i32
    %c0_i32 = arith.constant 0 : i32
    %3 = arith.addi %2, %c0_i32 : i32
    %4 = arith.index_cast %3 : i32 to index
    %5 = memref.load %arg2[%4] : memref<32xi32, #tpu.memory_space<smem>>
    %6 = arith.index_cast %5 : i32 to index
    %c0 = arith.constant 0 : index
    %7 = vector.load %arg3[%6, %c0] : memref<16x32xf32, #tpu.memory_space<vmem>>, vector<1x32xf32>
    %8 = arith.index_cast %c0_i32 : i32 to index
    %c0_1 = arith.constant 0 : index
    %9 = vector.load %arg4[%8, %c0_1] : memref<16x32xf32, #tpu.memory_space<vmem>>, vector<1x32xf32>
    %10 = arith.addf %7, %9 : vector<1x32xf32>
    %c0_2 = arith.constant 0 : index
    %11 = arith.index_cast %c0_i32 : i32 to index
    %c0_3 = arith.constant 0 : index
    %12 = vector.load %arg5[%c0_2, %11, %c0_3] : memref<1x16x32xf32, #tpu.memory_space<vmem>>, vector<1x1x32xf32>
    %13 = vector.shape_cast %12 : vector<1x1x32xf32> to vector<1x32xf32>
    %14 = vector.shape_cast %10 : vector<1x32xf32> to vector<1x1x32xf32>
    tpu.vector_store %arg5[%c0_2, %11, %c0_3], %14 {strides = array<i32>} : memref<1x16x32xf32, #tpu.memory_space<vmem>>, vector<1x1x32xf32>,
    %c1_i32 = arith.constant 1 : i32
    %15 = arith.addi %2, %c1_i32 : i32
    %16 = arith.index_cast %15 : i32 to index
    %17 = memref.load %arg2[%16] : memref<32xi32, #tpu.memory_space<smem>>
    %18 = arith.index_cast %17 : i32 to index
    %c0_4 = arith.constant 0 : index
    %19 = vector.load %arg3[%18, %c0_4] : memref<16x32xf32, #tpu.memory_space<vmem>>, vector<1x32xf32>
    %20 = arith.index_cast %c1_i32 : i32 to index
    %c0_5 = arith.constant 0 : index
    %21 = vector.load %arg4[%20, %c0_5] : memref<16x32xf32, #tpu.memory_space<vmem>>, vector<1x32xf32>
    %22 = arith.addf %19, %21 : vector<1x32xf32>
    %c0_6 = arith.constant 0 : index
    %23 = arith.index_cast %c1_i32 : i32 to index
    %c0_7 = arith.constant 0 : index
    %24 = vector.load %arg5[%c0_6, %23, %c0_7] : memref<1x16x32xf32, #tpu.memory_space<vmem>>, vector<1x1x32xf32>
    %25 = vector.shape_cast %24 : vector<1x1x32xf32> to vector<1x32xf32>
    %26 = vector.shape_cast %22 : vector<1x32xf32> to vector<1x1x32xf32>
    tpu.vector_store %arg5[%c0_6, %23, %c0_7], %26 {strides = array<i32>} : memref<1x16x32xf32, #tpu.memory_space<vmem>>, vector<1x1x32xf32>,
    %c2_i32 = arith.constant 2 : i32
    %27 = arith.addi %2, %c2_i32 : i32
    %28 = arith.index_cast %27 : i32 to index
    %29 = memref.load %arg2[%28] : memref<32xi32, #tpu.memory_space<smem>>
    %30 = arith.index_cast %29 : i32 to index
    %c0_8 = arith.constant 0 : index
    %31 = vector.load %arg3[%30, %c0_8] : memref<16x32xf32, #tpu.memory_space<vmem>>, vector<1x32xf32>
    %32 = arith.index_cast %c2_i32 : i32 to index
    %c0_9 = arith.constant 0 : index
    %33 = vector.load %arg4[%32, %c0_9] : memref<16x32xf32, #tpu.memory_space<vmem>>, vector<1x32xf32>
    %34 = arith.addf %31, %33 : vector<1x32xf32>
    %c0_10 = arith.constant 0 : index
    %35 = arith.index_cast %c2_i32 : i32 to index
    %c0_11 = arith.constant 0 : index
    %36 = vector.load %arg5[%c0_10, %35, %c0_11] : memref<1x16x32xf32, #tpu.memory_space<vmem>>, vector<1x1x32xf32>
    %37 = vector.shape_cast %36 : vector<1x1x32xf32> to vector<1x32xf32>
    %38 = vector.shape_cast %34 : vector<1x32xf32> to vector<1x1x32xf32>
    tpu.vector_store %arg5[%c0_10, %35, %c0_11], %38 {strides = array<i32>} : memref<1x16x32xf32, #tpu.memory_space<vmem>>, vector<1x1x32xf32>,
    %c3_i32 = arith.constant 3 : i32
    %39 = arith.addi %2, %c3_i32 : i32
    %40 = arith.index_cast %39 : i32 to index
    %41 = memref.load %arg2[%40] : memref<32xi32, #tpu.memory_space<smem>>
    %42 = arith.index_cast %41 : i32 to index
    %c0_12 = arith.constant 0 : index
    %43 = vector.load %arg3[%42, %c0_12] : memref<16x32xf32, #tpu.memory_space<vmem>>, vector<1x32xf32>
    %44 = arith.index_cast %c3_i32 : i32 to index
    %c0_13 = arith.constant 0 : index
    %45 = vector.load %arg4[%44, %c0_13] : memref<16x32xf32, #tpu.memory_space<vmem>>, vector<1x32xf32>
    %46 = arith.addf %43, %45 : vector<1x32xf32>
    %c0_14 = arith.constant 0 : index
    %47 = arith.index_cast %c3_i32 : i32 to index
    %c0_15 = arith.constant 0 : index
    %48 = vector.load %arg5[%c0_14, %47, %c0_15] : memref<1x16x32xf32, #tpu.memory_space<vmem>>, vector<1x1x32xf32>
    %49 = vector.shape_cast %48 : vector<1x1x32xf32> to vector<1x32xf32>
    %50 = vector.shape_cast %46 : vector<1x32xf32> to vector<1x1x32xf32>
    tpu.vector_store %arg5[%c0_14, %47, %c0_15], %50 {strides = array<i32>} : memref<1x16x32xf32, #tpu.memory_space<vmem>>, vector<1x1x32xf32>,
    %c4_i32 = arith.constant 4 : i32
    %51 = arith.addi %2, %c4_i32 : i32
    %52 = arith.index_cast %51 : i32 to index
    %53 = memref.load %arg2[%52] : memref<32xi32, #tpu.memory_space<smem>>
    %54 = arith.index_cast %53 : i32 to index
    %c0_16 = arith.constant 0 : index
    %55 = vector.load %arg3[%54, %c0_16] : memref<16x32xf32, #tpu.memory_space<vmem>>, vector<1x32xf32>
    %56 = arith.index_cast %c4_i32 : i32 to index
    %c0_17 = arith.constant 0 : index
    %57 = vector.load %arg4[%56, %c0_17] : memref<16x32xf32, #tpu.memory_space<vmem>>, vector<1x32xf32>
    %58 = arith.addf %55, %57 : vector<1x32xf32>
    %c0_18 = arith.constant 0 : index
    %59 = arith.index_cast %c4_i32 : i32 to index
    %c0_19 = arith.constant 0 : index
    %60 = vector.load %arg5[%c0_18, %59, %c0_19] : memref<1x16x32xf32, #tpu.memory_space<vmem>>, vector<1x1x32xf32>
    %61 = vector.shape_cast %60 : vector<1x1x32xf32> to vector<1x32xf32>
    %62 = vector.shape_cast %58 : vector<1x32xf32> to vector<1x1x32xf32>
    tpu.vector_store %arg5[%c0_18, %59, %c0_19], %62 {strides = array<i32>} : memref<1x16x32xf32, #tpu.memory_space<vmem>>, vector<1x1x32xf32>,
    %c5_i32 = arith.constant 5 : i32
    %63 = arith.addi %2, %c5_i32 : i32
    %64 = arith.index_cast %63 : i32 to index
    %65 = memref.load %arg2[%64] : memref<32xi32, #tpu.memory_space<smem>>
    %66 = arith.index_cast %65 : i32 to index
    %c0_20 = arith.constant 0 : index
    %67 = vector.load %arg3[%66, %c0_20] : memref<16x32xf32, #tpu.memory_space<vmem>>, vector<1x32xf32>
    %68 = arith.index_cast %c5_i32 : i32 to index
    %c0_21 = arith.constant 0 : index
    %69 = vector.load %arg4[%68, %c0_21] : memref<16x32xf32, #tpu.memory_space<vmem>>, vector<1x32xf32>
    %70 = arith.addf %67, %69 : vector<1x32xf32>
    %c0_22 = arith.constant 0 : index
    %71 = arith.index_cast %c5_i32 : i32 to index
    %c0_23 = arith.constant 0 : index
    %72 = vector.load %arg5[%c0_22, %71, %c0_23] : memref<1x16x32xf32, #tpu.memory_space<vmem>>, vector<1x1x32xf32>
    %73 = vector.shape_cast %72 : vector<1x1x32xf32> to vector<1x32xf32>
    %74 = vector.shape_cast %70 : vector<1x32xf32> to vector<1x1x32xf32>
    tpu.vector_store %arg5[%c0_22, %71, %c0_23], %74 {strides = array<i32>} : memref<1x16x32xf32, #tpu.memory_space<vmem>>, vector<1x1x32xf32>,
    %c6_i32 = arith.constant 6 : i32
    %75 = arith.addi %2, %c6_i32 : i32
    %76 = arith.index_cast %75 : i32 to index
    %77 = memref.load %arg2[%76] : memref<32xi32, #tpu.memory_space<smem>>
    %78 = arith.index_cast %77 : i32 to index
    %c0_24 = arith.constant 0 : index
    %79 = vector.load %arg3[%78, %c0_24] : memref<16x32xf32, #tpu.memory_space<vmem>>, vector<1x32xf32>
    %80 = arith.index_cast %c6_i32 : i32 to index
    %c0_25 = arith.constant 0 : index
    %81 = vector.load %arg4[%80, %c0_25] : memref<16x32xf32, #tpu.memory_space<vmem>>, vector<1x32xf32>
    %82 = arith.addf %79, %81 : vector<1x32xf32>
    %c0_26 = arith.constant 0 : index
    %83 = arith.index_cast %c6_i32 : i32 to index
    %c0_27 = arith.constant 0 : index
    %84 = vector.load %arg5[%c0_26, %83, %c0_27] : memref<1x16x32xf32, #tpu.memory_space<vmem>>, vector<1x1x32xf32>
    %85 = vector.shape_cast %84 : vector<1x1x32xf32> to vector<1x32xf32>
    %86 = vector.shape_cast %82 : vector<1x32xf32> to vector<1x1x32xf32>
    tpu.vector_store %arg5[%c0_26, %83, %c0_27], %86 {strides = array<i32>} : memref<1x16x32xf32, #tpu.memory_space<vmem>>, vector<1x1x32xf32>,
    %c7_i32 = arith.constant 7 : i32
    %87 = arith.addi %2, %c7_i32 : i32
    %88 = arith.index_cast %87 : i32 to index
    %89 = memref.load %arg2[%88] : memref<32xi32, #tpu.memory_space<smem>>
    %90 = arith.index_cast %89 : i32 to index
    %c0_28 = arith.constant 0 : index
    %91 = vector.load %arg3[%90, %c0_28] : memref<16x32xf32, #tpu.memory_space<vmem>>, vector<1x32xf32>
    %92 = arith.index_cast %c7_i32 : i32 to index
    %c0_29 = arith.constant 0 : index
    %93 = vector.load %arg4[%92, %c0_29] : memref<16x32xf32, #tpu.memory_space<vmem>>, vector<1x32xf32>
    %94 = arith.addf %91, %93 : vector<1x32xf32>
    %c0_30 = arith.constant 0 : index
    %95 = arith.index_cast %c7_i32 : i32 to index
    %c0_31 = arith.constant 0 : index
    %96 = vector.load %arg5[%c0_30, %95, %c0_31] : memref<1x16x32xf32, #tpu.memory_space<vmem>>, vector<1x1x32xf32>
    %97 = vector.shape_cast %96 : vector<1x1x32xf32> to vector<1x32xf32>
    %98 = vector.shape_cast %94 : vector<1x32xf32> to vector<1x1x32xf32>
    tpu.vector_store %arg5[%c0_30, %95, %c0_31], %98 {strides = array<i32>} : memref<1x16x32xf32, #tpu.memory_space<vmem>>, vector<1x1x32xf32>,
    %c8_i32 = arith.constant 8 : i32
    %99 = arith.addi %2, %c8_i32 : i32
    %100 = arith.index_cast %99 : i32 to index
    %101 = memref.load %arg2[%100] : memref<32xi32, #tpu.memory_space<smem>>
    %102 = arith.index_cast %101 : i32 to index
    %c0_32 = arith.constant 0 : index
    %103 = vector.load %arg3[%102, %c0_32] : memref<16x32xf32, #tpu.memory_space<vmem>>, vector<1x32xf32>
    %104 = arith.index_cast %c8_i32 : i32 to index
    %c0_33 = arith.constant 0 : index
    %105 = vector.load %arg4[%104, %c0_33] : memref<16x32xf32, #tpu.memory_space<vmem>>, vector<1x32xf32>
    %106 = arith.addf %103, %105 : vector<1x32xf32>
    %c0_34 = arith.constant 0 : index
    %107 = arith.index_cast %c8_i32 : i32 to index
    %c0_35 = arith.constant 0 : index
    %108 = vector.load %arg5[%c0_34, %107, %c0_35] : memref<1x16x32xf32, #tpu.memory_space<vmem>>, vector<1x1x32xf32>
    %109 = vector.shape_cast %108 : vector<1x1x32xf32> to vector<1x32xf32>
    %110 = vector.shape_cast %106 : vector<1x32xf32> to vector<1x1x32xf32>
    tpu.vector_store %arg5[%c0_34, %107, %c0_35], %110 {strides = array<i32>} : memref<1x16x32xf32, #tpu.memory_space<vmem>>, vector<1x1x32xf32>,
    %c9_i32 = arith.constant 9 : i32
    %111 = arith.addi %2, %c9_i32 : i32
    %112 = arith.index_cast %111 : i32 to index
    %113 = memref.load %arg2[%112] : memref<32xi32, #tpu.memory_space<smem>>
    %114 = arith.index_cast %113 : i32 to index
    %c0_36 = arith.constant 0 : index
    %115 = vector.load %arg3[%114, %c0_36] : memref<16x32xf32, #tpu.memory_space<vmem>>, vector<1x32xf32>
    %116 = arith.index_cast %c9_i32 : i32 to index
    %c0_37 = arith.constant 0 : index
    %117 = vector.load %arg4[%116, %c0_37] : memref<16x32xf32, #tpu.memory_space<vmem>>, vector<1x32xf32>
    %118 = arith.addf %115, %117 : vector<1x32xf32>
    %c0_38 = arith.constant 0 : index
    %119 = arith.index_cast %c9_i32 : i32 to index
    %c0_39 = arith.constant 0 : index
    %120 = vector.load %arg5[%c0_38, %119, %c0_39] : memref<1x16x32xf32, #tpu.memory_space<vmem>>, vector<1x1x32xf32>
    %121 = vector.shape_cast %120 : vector<1x1x32xf32> to vector<1x32xf32>
    %122 = vector.shape_cast %118 : vector<1x32xf32> to vector<1x1x32xf32>
    tpu.vector_store %arg5[%c0_38, %119, %c0_39], %122 {strides = array<i32>} : memref<1x16x32xf32, #tpu.memory_space<vmem>>, vector<1x1x32xf32>,
    %c10_i32 = arith.constant 10 : i32
    %123 = arith.addi %2, %c10_i32 : i32
    %124 = arith.index_cast %123 : i32 to index
    %125 = memref.load %arg2[%124] : memref<32xi32, #tpu.memory_space<smem>>
    %126 = arith.index_cast %125 : i32 to index
    %c0_40 = arith.constant 0 : index
    %127 = vector.load %arg3[%126, %c0_40] : memref<16x32xf32, #tpu.memory_space<vmem>>, vector<1x32xf32>
    %128 = arith.index_cast %c10_i32 : i32 to index
    %c0_41 = arith.constant 0 : index
    %129 = vector.load %arg4[%128, %c0_41] : memref<16x32xf32, #tpu.memory_space<vmem>>, vector<1x32xf32>
    %130 = arith.addf %127, %129 : vector<1x32xf32>
    %c0_42 = arith.constant 0 : index
    %131 = arith.index_cast %c10_i32 : i32 to index
    %c0_43 = arith.constant 0 : index
    %132 = vector.load %arg5[%c0_42, %131, %c0_43] : memref<1x16x32xf32, #tpu.memory_space<vmem>>, vector<1x1x32xf32>
    %133 = vector.shape_cast %132 : vector<1x1x32xf32> to vector<1x32xf32>
    %134 = vector.shape_cast %130 : vector<1x32xf32> to vector<1x1x32xf32>
    tpu.vector_store %arg5[%c0_42, %131, %c0_43], %134 {strides = array<i32>} : memref<1x16x32xf32, #tpu.memory_space<vmem>>, vector<1x1x32xf32>,
    %c11_i32 = arith.constant 11 : i32
    %135 = arith.addi %2, %c11_i32 : i32
    %136 = arith.index_cast %135 : i32 to index
    %137 = memref.load %arg2[%136] : memref<32xi32, #tpu.memory_space<smem>>
    %138 = arith.index_cast %137 : i32 to index
    %c0_44 = arith.constant 0 : index
    %139 = vector.load %arg3[%138, %c0_44] : memref<16x32xf32, #tpu.memory_space<vmem>>, vector<1x32xf32>
    %140 = arith.index_cast %c11_i32 : i32 to index
    %c0_45 = arith.constant 0 : index
    %141 = vector.load %arg4[%140, %c0_45] : memref<16x32xf32, #tpu.memory_space<vmem>>, vector<1x32xf32>
    %142 = arith.addf %139, %141 : vector<1x32xf32>
    %c0_46 = arith.constant 0 : index
    %143 = arith.index_cast %c11_i32 : i32 to index
    %c0_47 = arith.constant 0 : index
    %144 = vector.load %arg5[%c0_46, %143, %c0_47] : memref<1x16x32xf32, #tpu.memory_space<vmem>>, vector<1x1x32xf32>
    %145 = vector.shape_cast %144 : vector<1x1x32xf32> to vector<1x32xf32>
    %146 = vector.shape_cast %142 : vector<1x32xf32> to vector<1x1x32xf32>
    tpu.vector_store %arg5[%c0_46, %143, %c0_47], %146 {strides = array<i32>} : memref<1x16x32xf32, #tpu.memory_space<vmem>>, vector<1x1x32xf32>,
    %c12_i32 = arith.constant 12 : i32
    %147 = arith.addi %2, %c12_i32 : i32
    %148 = arith.index_cast %147 : i32 to index
    %149 = memref.load %arg2[%148] : memref<32xi32, #tpu.memory_space<smem>>
    %150 = arith.index_cast %149 : i32 to index
    %c0_48 = arith.constant 0 : index
    %151 = vector.load %arg3[%150, %c0_48] : memref<16x32xf32, #tpu.memory_space<vmem>>, vector<1x32xf32>
    %152 = arith.index_cast %c12_i32 : i32 to index
    %c0_49 = arith.constant 0 : index
    %153 = vector.load %arg4[%152, %c0_49] : memref<16x32xf32, #tpu.memory_space<vmem>>, vector<1x32xf32>
    %154 = arith.addf %151, %153 : vector<1x32xf32>
    %c0_50 = arith.constant 0 : index
    %155 = arith.index_cast %c12_i32 : i32 to index
    %c0_51 = arith.constant 0 : index
    %156 = vector.load %arg5[%c0_50, %155, %c0_51] : memref<1x16x32xf32, #tpu.memory_space<vmem>>, vector<1x1x32xf32>
    %157 = vector.shape_cast %156 : vector<1x1x32xf32> to vector<1x32xf32>
    %158 = vector.shape_cast %154 : vector<1x32xf32> to vector<1x1x32xf32>
    tpu.vector_store %arg5[%c0_50, %155, %c0_51], %158 {strides = array<i32>} : memref<1x16x32xf32, #tpu.memory_space<vmem>>, vector<1x1x32xf32>,
    %c13_i32 = arith.constant 13 : i32
    %159 = arith.addi %2, %c13_i32 : i32
    %160 = arith.index_cast %159 : i32 to index
    %161 = memref.load %arg2[%160] : memref<32xi32, #tpu.memory_space<smem>>
    %162 = arith.index_cast %161 : i32 to index
    %c0_52 = arith.constant 0 : index
    %163 = vector.load %arg3[%162, %c0_52] : memref<16x32xf32, #tpu.memory_space<vmem>>, vector<1x32xf32>
    %164 = arith.index_cast %c13_i32 : i32 to index
    %c0_53 = arith.constant 0 : index
    %165 = vector.load %arg4[%164, %c0_53] : memref<16x32xf32, #tpu.memory_space<vmem>>, vector<1x32xf32>
    %166 = arith.addf %163, %165 : vector<1x32xf32>
    %c0_54 = arith.constant 0 : index
    %167 = arith.index_cast %c13_i32 : i32 to index
    %c0_55 = arith.constant 0 : index
    %168 = vector.load %arg5[%c0_54, %167, %c0_55] : memref<1x16x32xf32, #tpu.memory_space<vmem>>, vector<1x1x32xf32>
    %169 = vector.shape_cast %168 : vector<1x1x32xf32> to vector<1x32xf32>
    %170 = vector.shape_cast %166 : vector<1x32xf32> to vector<1x1x32xf32>
    tpu.vector_store %arg5[%c0_54, %167, %c0_55], %170 {strides = array<i32>} : memref<1x16x32xf32, #tpu.memory_space<vmem>>, vector<1x1x32xf32>,
    %c14_i32 = arith.constant 14 : i32
    %171 = arith.addi %2, %c14_i32 : i32
    %172 = arith.index_cast %171 : i32 to index
    %173 = memref.load %arg2[%172] : memref<32xi32, #tpu.memory_space<smem>>
    %174 = arith.index_cast %173 : i32 to index
    %c0_56 = arith.constant 0 : index
    %175 = vector.load %arg3[%174, %c0_56] : memref<16x32xf32, #tpu.memory_space<vmem>>, vector<1x32xf32>
    %176 = arith.index_cast %c14_i32 : i32 to index
    %c0_57 = arith.constant 0 : index
    %177 = vector.load %arg4[%176, %c0_57] : memref<16x32xf32, #tpu.memory_space<vmem>>, vector<1x32xf32>
    %178 = arith.addf %175, %177 : vector<1x32xf32>
    %c0_58 = arith.constant 0 : index
    %179 = arith.index_cast %c14_i32 : i32 to index
    %c0_59 = arith.constant 0 : index
    %180 = vector.load %arg5[%c0_58, %179, %c0_59] : memref<1x16x32xf32, #tpu.memory_space<vmem>>, vector<1x1x32xf32>
    %181 = vector.shape_cast %180 : vector<1x1x32xf32> to vector<1x32xf32>
    %182 = vector.shape_cast %178 : vector<1x32xf32> to vector<1x1x32xf32>
    tpu.vector_store %arg5[%c0_58, %179, %c0_59], %182 {strides = array<i32>} : memref<1x16x32xf32, #tpu.memory_space<vmem>>, vector<1x1x32xf32>,
    %c15_i32 = arith.constant 15 : i32
    %183 = arith.addi %2, %c15_i32 : i32
    %184 = arith.index_cast %183 : i32 to index
    %185 = memref.load %arg2[%184] : memref<32xi32, #tpu.memory_space<smem>>
    %186 = arith.index_cast %185 : i32 to index
    %c0_60 = arith.constant 0 : index
    %187 = vector.load %arg3[%186, %c0_60] : memref<16x32xf32, #tpu.memory_space<vmem>>, vector<1x32xf32>
    %188 = arith.index_cast %c15_i32 : i32 to index
    %c0_61 = arith.constant 0 : index
    %189 = vector.load %arg4[%188, %c0_61] : memref<16x32xf32, #tpu.memory_space<vmem>>, vector<1x32xf32>
    %190 = arith.addf %187, %189 : vector<1x32xf32>
    %c0_62 = arith.constant 0 : index
    %191 = arith.index_cast %c15_i32 : i32 to index
    %c0_63 = arith.constant 0 : index
    %192 = vector.load %arg5[%c0_62, %191, %c0_63] : memref<1x16x32xf32, #tpu.memory_space<vmem>>, vector<1x1x32xf32>
    %193 = vector.shape_cast %192 : vector<1x1x32xf32> to vector<1x32xf32>
    %194 = vector.shape_cast %190 : vector<1x32xf32> to vector<1x1x32xf32>
    tpu.vector_store %arg5[%c0_62, %191, %c0_63], %194 {strides = array<i32>} : memref<1x16x32xf32, #tpu.memory_space<vmem>>, vector<1x1x32xf32>,
    %c16_i32_64 = arith.constant 16 : i32
    return
  }
  func.func @transform_0(%arg0: i32, %arg1: i32, %arg2: memref<32xi32, #tpu.memory_space<smem>>) -> (i32, i32) {
    %c0_i32 = arith.constant 0 : i32
    %c0_i32_0 = arith.constant 0 : i32
    %c0_i32_1 = arith.constant 0 : i32
    return %c0_i32, %c0_i32_0 : i32, i32
  }
  func.func @transform_1(%arg0: i32, %arg1: i32, %arg2: memref<32xi32, #tpu.memory_space<smem>>) -> (i32, i32) {
    %c0_i32 = arith.constant 0 : i32
    %c0_i32_0 = arith.constant 0 : i32
    return %arg1, %c0_i32 : i32, i32
  }
  func.func @transform_2(%arg0: i32, %arg1: i32, %arg2: memref<32xi32, #tpu.memory_space<smem>>) -> (i32, i32, i32) {
    %c0_i32 = arith.constant 0 : i32
    %c0_i32_0 = arith.constant 0 : i32
    return %arg0, %arg1, %c0_i32 : i32, i32, i32
  }
}

</mosaic_0001>

<llo_original>
// kernel: tpu_custom_call.1
$region0: #{tpu_custom_call.1}
  #allocation0 [shape = 'u32[]', space=smem, size = 0x4, offset = 0x4, fixed_abs, tag = 'smem constant byte address 0x4 - core index']
  #allocation1 [shape = 'u32[72,128]{1,0:T(1,128)}', space=vmem, size = 0x9000, scoped, tag = 'internal scratch']
  #allocation2 [shape = 's32[1]{0}', space=sflag, size = 0x4, scoped, tag = 'scoped memory for tpu_custom_call.1']
  #allocation3 [shape = 'u8[512]{0}', space=smem, size = 0x200, scoped, tag = 'prefetched SMEM operand 0']
  %s0 = inlined_call_operand.hbm [shape: s32[32], index: 0, kind: input, shape index: {}]
  %s1 = inlined_call_operand.hbm [shape: f32[16,32], index: 1, kind: input, shape index: {}]
  %s2 = inlined_call_operand.hbm [shape: f32[16,32], index: 2, kind: input, shape index: {}]
  %s3 = inlined_call_operand.hbm [shape: f32[2,16,32], index: 3, kind: output, shape index: {}]
  %s4 = sld [smem:[#allocation0]]
  $region49: #{tpu_custom_call.1} parent=0
    _
  %s6 = ssub.s32 1, %s4
  %s7 = scalar_select 0, %s6, %s4
  %s9 = sshll.u32 %s0, 4
  %s10 = int_to_ptr.hbm [resolvable:$true] %s9
  %12 = dma.hbm_to_smem %s10, 16, [#allocation3], [#allocation2]
  %14 = dma.done [#allocation2], 16
  %15 = sfence
  $region1: #{tpu_custom_call.1} parent=0
    #allocation4 [shape = 'u8[8192]{0}', space=vmem, size = 0x2000, scoped, tag = 'input window, operand 1, single buffered']
    #allocation5 [shape = 's32[2]{0}', space=sflag, size = 0x8, scoped, tag = 'scoped memory for tpu_custom_call.1']
    #allocation6 [shape = 's32[2]{0}', space=sflag, size = 0x8, scoped, tag = 'scoped memory for tpu_custom_call.1']
    #allocation7 [shape = 'u8[8192]{0}', space=vmem, size = 0x2000, scoped, tag = 'input window, operand 2, single buffered']
    #allocation8 [shape = 's32[1]{0}', space=sflag, size = 0x4, scoped, tag = 'scoped memory for tpu_custom_call.1']
    #allocation9 [shape = 'u8[16384]{0}', space=vmem, size = 0x4000, scoped, tag = 'output window, operand 0']
    %16 = vsyncpa [#allocation5], 0
    %17 = vsyncpa [#allocation8], 0
    %18 = vsyncpa [#allocation6], 0
    %s19 = scalar_lea.sflag [#allocation6], 1
    %20 = vsyncpa %s19, 0
    loop: start=0, step=1, limit=4
    $region2: #{tpu_custom_call.1} parent=1 // loop_pre_header
      _
    $region3: #{tpu_custom_call.1} parent=1 // loop_header
      %s22 = sphi 0, %s26
      %p23 = scmp.ge.s32.totalorder %s22, 4
      %s29 = sphi 0, %s41
      %s30 = sphi 0, %s37
      %s31 = sphi 0, %s29
      %s32 = sphi 0, %s30
      %s33 = sphi 0, %s31
      %s34 = sphi 0, %s32
      %s42 = sphi 0, %s42
      %s44 = sphi 0, %s42
      %s45 = sphi 0, %s44
      %s59 = sphi 0, %s45
      %s65 = sphi 0, %s67
      %s68 = sphi 0, %s65
      %s69 = sphi 0, %s68
      %s85 = sphi 0, %s69
      %s93 = sphi 0, %s95
      %s96 = sphi 0, %s93
      %s97 = sphi 0, %s96
      %s113 = sphi 0, %s97
    $region4: #{tpu_custom_call.1} parent=1 // loop_header_branch
      %25 = sbr.rel (%p23) target = $region8
    $region5: #{tpu_custom_call.1} parent=1 // loop_body
      %s27 = ssub.s32 %s22, 1
      %s28 = ssub.s32 %s22, 2
      %s35 = sadd.s32 1, %s30
      %p36 = scmp.ge.s32.totalorder %s35, 1
      %s37 = scalar_select %p36, 0, %s35
      %s38 = sadd.s32 1, %s29
      %s39 = scalar_select %p36, %s38, %s29
      %p40 = scmp.ge.s32.totalorder %s39, 2
      %s41 = scalar_select %p40, 0, %s39
      %s43 = sadd.s32 %s42, 1
      %p46 = scmp.eq.s32.totalorder %s22, 1
      %p47 = scmp.ne.s32.totalorder %s42, %s44
      %p48 = scmp.eq.s32.totalorder %s22, 0
      %p49 = por %p47, %p48
      %p50 = scmp.ne.s32.totalorder %s42, %s44
      %p51 = scmp.eq.s32.totalorder %s27, 1
      %p52 = por %p50, %p51
      %p53 = scmp.ne.s32.totalorder %s44, %s45
      %p54 = scmp.eq.s32.totalorder %s27, 0
      %p55 = por %p53, %p54
      %p56 = scmp.ne.s32.totalorder %s44, %s45
      %p57 = scmp.eq.s32.totalorder %s28, 1
      %p58 = por %p56, %p57
      %p60 = scmp.ne.s32.totalorder %s45, %s59
      %p61 = scmp.eq.s32.totalorder %s28, 0
      %p62 = por %p60, %p61
      %s63 = ssub.s32 %s30, %s37
      %p64 = scmp.eq.s32.totalorder %s63, 0
      %s66 = sadd.s32 %s65, 1
      %s67 = scalar_select %p64, %s65, %s66
      %p70 = pneg %p64
      %p71 = scmp.eq.s32.totalorder %s22, 1
      %p72 = por %p70, %p71
      %p73 = scmp.ne.s32.totalorder %s65, %s68
      %p74 = scmp.eq.s32.totalorder %s22, 0
      %p75 = por %p73, %p74
      %p76 = scmp.ne.s32.totalorder %s65, %s68
      %p77 = scmp.eq.s32.totalorder %s27, 1
      %p78 = por %p76, %p77
      %p79 = scmp.ne.s32.totalorder %s68, %s69
      %p80 = scmp.eq.s32.totalorder %s27, 0
      %p81 = por %p79, %p80
      %p82 = scmp.ne.s32.totalorder %s68, %s69
      %p83 = scmp.eq.s32.totalorder %s28, 1
      %p84 = por %p82, %p83
      %p86 = scmp.ne.s32.totalorder %s69, %s85
      %p87 = scmp.eq.s32.totalorder %s28, 0
      %p88 = por %p86, %p87
      %s89 = ssub.s32 %s29, %s41
      %s90 = ssub.s32 %s30, %s37
      %s91 = sor.u32 %s89, %s90
      %p92 = scmp.eq.s32.totalorder %s91, 0
      %s94 = sadd.s32 %s93, 1
      %s95 = scalar_select %p92, %s93, %s94
      %p98 = pneg %p92
      %p99 = scmp.eq.s32.totalorder %s22, 1
      %p100 = por %p98, %p99
      %p101 = scmp.ne.s32.totalorder %s93, %s96
      %p102 = scmp.eq.s32.totalorder %s22, 0
      %p103 = por %p101, %p102
      %p104 = scmp.ne.s32.totalorder %s93, %s96
      %p105 = scmp.eq.s32.totalorder %s27, 1
      %p106 = por %p104, %p105
      %p107 = scmp.ne.s32.totalorder %s96, %s97
      %p108 = scmp.eq.s32.totalorder %s27, 0
      %p109 = por %p107, %p108
      %p110 = scmp.ne.s32.totalorder %s96, %s97
      %p111 = scmp.eq.s32.totalorder %s28, 1
      %p112 = por %p110, %p111
      %p114 = scmp.ne.s32.totalorder %s97, %s113
      %p115 = scmp.eq.s32.totalorder %s28, 0
      %p116 = por %p114, %p115
      %p117 = scmp.le.s32.totalorder 1, %s22
      %p118 = scmp.lt.s32.totalorder %s22, 3
      %p119 = pnand %p117, %p118
      %p120 = pneg %p119
      // Predicated region
      $region9: #{tpu_custom_call.1} parent=5 // pred_check
        _
      $region10: #{tpu_custom_call.1} parent=5 // pred_check_branch
        %122 = sbr.rel (%p119) target = $region12
      $region11: #{tpu_custom_call.1} parent=5 // pred_region
        %s123 = ssub.s32 %s22, 1
        // Predicated region
        $region13: #{tpu_custom_call.1} parent=11 // pred_check
          %p124 = pneg %p55
        $region14: #{tpu_custom_call.1} parent=11 // pred_check_branch
          %126 = sbr.rel (%p124) target = $region16
        $region15: #{tpu_custom_call.1} parent=11 // pred_region
          %128 = vsyncadd [#allocation5], 0
          %s129 = sshll.u32 %s1, 4
          %s130 = int_to_ptr.hbm [resolvable:$true] %s129
          %s131 = sshll.u32 [#allocation4], 4
          %s132 = int_to_ptr.vmem [resolvable:$true] %s131
          %137 = dma.hbm_to_vmem [thread:$0]  %s130, 256, %s132, [#allocation5], 128, 128, 8
        $region16: #{tpu_custom_call.1} parent=11 // pred_fallthru
          _
        // Predicated region
        $region17: #{tpu_custom_call.1} parent=11 // pred_check
          %p138 = pneg %p81
        $region18: #{tpu_custom_call.1} parent=11 // pred_check_branch
          %140 = sbr.rel (%p138) target = $region20
        $region19: #{tpu_custom_call.1} parent=11 // pred_region
          %s141 = smul.u32 2, %s32
          %143 = vsyncadd [#allocation8], 0
          %s144 = smul.addr %s141, 8
          %s145 = scalar_lea.hbm %s2, %s144
          %s146 = sshll.u32 %s145, 4
          %s147 = int_to_ptr.hbm [resolvable:$true] %s146
          %s148 = sshll.u32 [#allocation7], 4
          %s149 = int_to_ptr.vmem [resolvable:$true] %s148
          %154 = dma.hbm_to_vmem [thread:$0]  %s147, 256, %s149, [#allocation8], 128, 128, 8
        $region20: #{tpu_custom_call.1} parent=11 // pred_fallthru
          _
      $region12: #{tpu_custom_call.1} parent=5 // pred_fallthru
        _
      %p155 = scmp.lt.s32.totalorder %s22, 2
      // Predicated region
      $region21: #{tpu_custom_call.1} parent=5 // pred_check
        %p156 = pneg %p155
      $region22: #{tpu_custom_call.1} parent=5 // pred_check_branch
        %158 = sbr.rel (%p156) target = $region24
      $region23: #{tpu_custom_call.1} parent=5 // pred_region
        _
      $region24: #{tpu_custom_call.1} parent=5 // pred_fallthru
        _
      %p159 = scmp.le.s32.totalorder 1, %s22
      %p160 = scmp.lt.s32.totalorder %s22, 3
      %p161 = pnand %p159, %p160
      %p162 = pneg %p161
      // Predicated region
      $region25: #{tpu_custom_call.1} parent=5 // pred_check
        _
      $region26: #{tpu_custom_call.1} parent=5 // pred_check_branch
        %164 = sbr.rel (%p161) target = $region28
      $region27: #{tpu_custom_call.1} parent=5 // pred_region
        %s165 = ssub.s32 %s22, 1
        // Predicated region
        $region29: #{tpu_custom_call.1} parent=27 // pred_check
          %p166 = pneg %p55
        $region30: #{tpu_custom_call.1} parent=27 // pred_check_branch
          %168 = sbr.rel (%p166) target = $region32
        $region31: #{tpu_custom_call.1} parent=27 // pred_region
          %170 = dma.done [#allocation5], 256
        $region32: #{tpu_custom_call.1} parent=27 // pred_fallthru
          _
        // Predicated region
        $region33: #{tpu_custom_call.1} parent=27 // pred_check
          %p171 = pneg %p81
        $region34: #{tpu_custom_call.1} parent=27 // pred_check_branch
          %173 = sbr.rel (%p171) target = $region36
        $region35: #{tpu_custom_call.1} parent=27 // pred_region
          %175 = dma.done [#allocation8], 256
        $region36: #{tpu_custom_call.1} parent=27 // pred_fallthru
          _
        %p176 = pneg %p55
        %p177 = pneg %p52
        %p178 = pneg %p81
        %p179 = pneg %p78
        %p180 = pneg %p109
        %p181 = pneg %p106
        %s182 = sand.u32 %s96, 1
        %s183 = scalar_lea.sflag [#allocation6], %s182
        %s184 = sand.u32 %s96, 1
        %s185 = smul.addr %s184, 16
        %s186 = scalar_lea.vmem [#allocation9], %s185
        %s187 = smul.u32 2, %s32
        %s188 = smul.u32 2, %s32
        %s189 = smul.u32 %s31, 16
        %s190 = smul.u32 %s32, 16
        %s191 = sadd.s32 %s189, %s190
        %s192 = sld [smem:[#allocation3 + %s191]]
        %s193 = scalar_lea.vmem [#allocation4], %s192
        %v194 = vld [vmem:[%s193] sm:$0x1]
        %v195 = vld [vmem:[#allocation7] sm:$0x1]
        %v196 = vadd.f32 %v194, %v195
        %vm197 = vcmask 253952
        %198 = vst.msk [vmem:[%s186] sm:$0x1] %vm197, %v196
        %s199 = sadd.s32 %s191, 1
        %s200 = sld [smem:[#allocation3 + %s199]]
        %s201 = scalar_lea.vmem [#allocation4], %s200
        %v202 = vld [vmem:[%s201] sm:$0x1]
        %v203 = vld [vmem:[#allocation7 + $0x1] sm:$0x1]
        %v204 = vadd.f32 %v202, %v203
        %205 = vst.msk [vmem:[%s186 + $0x1] sm:$0x1] %vm197, %v204
        %s206 = sadd.s32 %s191, 2
        %s207 = sld [smem:[#allocation3 + %s206]]
        %s208 = scalar_lea.vmem [#allocation4], %s207
        %v209 = vld [vmem:[%s208] sm:$0x1]
        %v210 = vld [vmem:[#allocation7 + $0x2] sm:$0x1]
        %v211 = vadd.f32 %v209, %v210
        %212 = vst.msk [vmem:[%s186 + $0x2] sm:$0x1] %vm197, %v211
        %s213 = sadd.s32 %s191, 3
        %s214 = sld [smem:[#allocation3 + %s213]]
        %s215 = scalar_lea.vmem [#allocation4], %s214
        %v216 = vld [vmem:[%s215] sm:$0x1]
        %v217 = vld [vmem:[#allocation7 + $0x3] sm:$0x1]
        %v218 = vadd.f32 %v216, %v217
        %219 = vst.msk [vmem:[%s186 + $0x3] sm:$0x1] %vm197, %v218
        %s220 = sadd.s32 %s191, 4
        %s221 = sld [smem:[#allocation3 + %s220]]
        %s222 = scalar_lea.vmem [#allocation4], %s221
        %v223 = vld [vmem:[%s222] sm:$0x1]
        %v224 = vld [vmem:[#allocation7 + $0x4] sm:$0x1]
        %v225 = vadd.f32 %v223, %v224
        %226 = vst.msk [vmem:[%s186 + $0x4] sm:$0x1] %vm197, %v225
        %s227 = sadd.s32 %s191, 5
        %s228 = sld [smem:[#allocation3 + %s227]]
        %s229 = scalar_lea.vmem [#allocation4], %s228
        %v230 = vld [vmem:[%s229] sm:$0x1]
        %v231 = vld [vmem:[#allocation7 + $0x5] sm:$0x1]
        %v232 = vadd.f32 %v230, %v231
        %233 = vst.msk [vmem:[%s186 + $0x5] sm:$0x1] %vm197, %v232
        %s234 = sadd.s32 %s191, 6
        %s235 = sld [smem:[#allocation3 + %s234]]
        %s236 = scalar_lea.vmem [#allocation4], %s235
        %v237 = vld [vmem:[%s236] sm:$0x1]
        %v238 = vld [vmem:[#allocation7 + $0x6] sm:$0x1]
        %v239 = vadd.f32 %v237, %v238
        %240 = vst.msk [vmem:[%s186 + $0x6] sm:$0x1] %vm197, %v239
        %s241 = sadd.s32 %s191, 7
        %s242 = sld [smem:[#allocation3 + %s241]]
        %s243 = scalar_lea.vmem [#allocation4], %s242
        %v244 = vld [vmem:[%s243] sm:$0x1]
        %v245 = vld [vmem:[#allocation7 + $0x7] sm:$0x1]
        %v246 = vadd.f32 %v244, %v245
        %247 = vst.msk [vmem:[%s186 + $0x7] sm:$0x1] %vm197, %v246
        %s248 = sadd.s32 %s191, 8
        %s249 = sld [smem:[#allocation3 + %s248]]
        %s250 = scalar_lea.vmem [#allocation4], %s249
        %v251 = vld [vmem:[%s250] sm:$0x1]
        %v252 = vld [vmem:[#allocation7 + $0x8] sm:$0x1]
        %v253 = vadd.f32 %v251, %v252
        %254 = vst.msk [vmem:[%s186 + $0x8] sm:$0x1] %vm197, %v253
        %s255 = sadd.s32 %s191, 9
        %s256 = sld [smem:[#allocation3 + %s255]]
        %s257 = scalar_lea.vmem [#allocation4], %s256
        %v258 = vld [vmem:[%s257] sm:$0x1]
        %v259 = vld [vmem:[#allocation7 + $0x9] sm:$0x1]
        %v260 = vadd.f32 %v258, %v259
        %261 = vst.msk [vmem:[%s186 + $0x9] sm:$0x1] %vm197, %v260
        %s262 = sadd.s32 %s191, 10
        %s263 = sld [smem:[#allocation3 + %s262]]
        %s264 = scalar_lea.vmem [#allocation4], %s263
        %v265 = vld [vmem:[%s264] sm:$0x1]
        %v266 = vld [vmem:[#allocation7 + $0xa] sm:$0x1]
        %v267 = vadd.f32 %v265, %v266
        %268 = vst.msk [vmem:[%s186 + $0xa] sm:$0x1] %vm197, %v267
        %s269 = sadd.s32 %s191, 11
        %s270 = sld [smem:[#allocation3 + %s269]]
        %s271 = scalar_lea.vmem [#allocation4], %s270
        %v272 = vld [vmem:[%s271] sm:$0x1]
        %v273 = vld [vmem:[#allocation7 + $0xb] sm:$0x1]
        %v274 = vadd.f32 %v272, %v273
        %275 = vst.msk [vmem:[%s186 + $0xb] sm:$0x1] %vm197, %v274
        %s276 = sadd.s32 %s191, 12
        %s277 = sld [smem:[#allocation3 + %s276]]
        %s278 = scalar_lea.vmem [#allocation4], %s277
        %v279 = vld [vmem:[%s278] sm:$0x1]
        %v280 = vld [vmem:[#allocation7 + $0xc] sm:$0x1]
        %v281 = vadd.f32 %v279, %v280
        %282 = vst.msk [vmem:[%s186 + $0xc] sm:$0x1] %vm197, %v281
        %s283 = sadd.s32 %s191, 13
        %s284 = sld [smem:[#allocation3 + %s283]]
        %s285 = scalar_lea.vmem [#allocation4], %s284
        %v286 = vld [vmem:[%s285] sm:$0x1]
        %v287 = vld [vmem:[#allocation7 + $0xd] sm:$0x1]
        %v288 = vadd.f32 %v286, %v287
        %289 = vst.msk [vmem:[%s186 + $0xd] sm:$0x1] %vm197, %v288
        %s290 = sadd.s32 %s191, 14
        %s291 = sld [smem:[#allocation3 + %s290]]
        %s292 = scalar_lea.vmem [#allocation4], %s291
        %v293 = vld [vmem:[%s292] sm:$0x1]
        %v294 = vld [vmem:[#allocation7 + $0xe] sm:$0x1]
        %v295 = vadd.f32 %v293, %v294
        %296 = vst.msk [vmem:[%s186 + $0xe] sm:$0x1] %vm197, %v295
        %s297 = sadd.s32 %s191, 15
        %s298 = sld [smem:[#allocation3 + %s297]]
        %s299 = scalar_lea.vmem [#allocation4], %s298
        %v300 = vld [vmem:[%s299] sm:$0x1]
        %v301 = vld [vmem:[#allocation7 + $0xf] sm:$0x1]
        %v302 = vadd.f32 %v300, %v301
        %303 = vst.msk [vmem:[%s186 + $0xf] sm:$0x1] %vm197, %v302
        %s304 = sand.u32 %s96, 1
        %s305 = scalar_lea.sflag [#allocation6], %s304
        %s306 = sand.u32 %s96, 1
        %s307 = smul.addr %s306, 16
        %s308 = scalar_lea.vmem [#allocation9], %s307
        // Predicated region
        $region37: #{tpu_custom_call.1} parent=27 // pred_check
          %p309 = pneg %p106
        $region38: #{tpu_custom_call.1} parent=27 // pred_check_branch
          %311 = sbr.rel (%p309) target = $region40
        $region39: #{tpu_custom_call.1} parent=27 // pred_region
          %s312 = smul.u32 2, %s32
          %314 = vsyncadd %s305, 0
          %s315 = smul.addr %s31, 2
          %s316 = sadd.s32 %s312, %s315
          %s317 = smul.addr %s316, 8
          %s318 = scalar_lea.hbm %s3, %s317
          %s319 = sshll.u32 %s308, 4
          %s320 = int_to_ptr.vmem [resolvable:$true] %s319
          %s321 = sshll.u32 %s318, 4
          %s322 = int_to_ptr.hbm [resolvable:$true] %s321
          %327 = dma.vmem_to_hbm [thread:$0]  %s320, 256, %s322, %s305, 128, 128, 8
        $region40: #{tpu_custom_call.1} parent=27 // pred_fallthru
          _
      $region28: #{tpu_custom_call.1} parent=5 // pred_fallthru
        _
      %p328 = scmp.le.s32.totalorder 2, %s22
      // Predicated region
      $region41: #{tpu_custom_call.1} parent=5 // pred_check
        %p329 = pneg %p328
      $region42: #{tpu_custom_call.1} parent=5 // pred_check_branch
        %331 = sbr.rel (%p329) target = $region44
      $region43: #{tpu_custom_call.1} parent=5 // pred_region
        %s332 = ssub.s32 %s22, 2
        // Predicated region
        $region45: #{tpu_custom_call.1} parent=43 // pred_check
          %p333 = pneg %p112
        $region46: #{tpu_custom_call.1} parent=43 // pred_check_branch
          %335 = sbr.rel (%p333) target = $region48
        $region47: #{tpu_custom_call.1} parent=43 // pred_region
          %s336 = sand.u32 %s97, 1
          %s337 = scalar_lea.sflag [#allocation6], %s336
          %s338 = sand.u32 %s97, 1
          %s339 = smul.addr %s338, 16
          %s340 = scalar_lea.vmem [#allocation9], %s339
          %342 = dma.done %s337, 256
        $region48: #{tpu_custom_call.1} parent=43 // pred_fallthru
          _
      $region44: #{tpu_custom_call.1} parent=5 // pred_fallthru
        _
    $region6: #{tpu_custom_call.1} parent=1 // loop_footer
      %s26 = sadd.s32 1, %s22
    $region7: #{tpu_custom_call.1} parent=1 // loop_footer_branch
      %21 = sbr.rel target = $region3
    $region8: #{tpu_custom_call.1} parent=1 // loop_exit
      _
    %343 = vsyncpa [#allocation5], 1
    %s344 = scalar_lea.sflag [#allocation5], 1
    %345 = vsyncpa %s344, 1
    %346 = vsyncpa [#allocation8], 1
    %347 = vsyncpa [#allocation6], 1
    %s348 = scalar_lea.sflag [#allocation6], 1
    %349 = vsyncpa %s348, 1

</llo_original>
